<compile_context>
chip_gen: v7x
topology: tpu7x:2x2x1
jax: 0.10.0
libtpu: 0.0.40
codegen_flags: <defaults>
</compile_context>

<pallas_src>
import jax
import jax.numpy as jnp
import numpy as np
from jax.experimental import pallas as pl
from jax.experimental.pallas import tpu as pltpu

LANE = 128          # pad feature dims to a full vreg lane width
NEG_SLOPE = 0.2     # GATConv default negative_slope
MASK_BIAS = -1e30   # additive bias for non-edges


def gat_model_kernel(x_ref, bias_ref, pool_ref,
                     w1_ref, aux1_ref, w2_ref, aux2_ref,
                     pooled_ref):
    f32 = jnp.float32
    bf16 = jnp.bfloat16
    adj_bias = bias_ref[...].astype(f32)            # [N, N] additive mask (0 / -1e30)

    def gat_conv(x, w, aux):
        # aux rows: 0 = a_src, 1 = a_dst, 2 = bias  (all zero-padded to LANE)
        h = jnp.dot(x.astype(bf16), w.astype(bf16),
                    preferred_element_type=f32)                           # [N, Fp]  (MXU)
        a_src = aux[0:1, :]
        a_dst = aux[1:2, :]
        b = aux[2:3, :]
        # destination score per row: VPU multiply + XLU lane reduce
        e_dst = jnp.sum(h * a_dst, axis=-1, keepdims=True)                # [N, 1]
        # source score row: single [1,Fp] x [N,Fp]^T contraction -> [1, N]
        # (replaces the old N x F x N all-ones matmul; N-fold fewer MXU pushes)
        src_row = jax.lax.dot_general(
            a_src, h, dimension_numbers=(((1,), (1,)), ((), ())),
            preferred_element_type=f32)                                   # [1, N]
        e = e_dst + src_row                              # e[i, j] for edge j -> i (VPU bcast add)
        e = jnp.where(e > 0, e, NEG_SLOPE * e)           # LeakyReLU(0.2)
        e = e + adj_bias                                 # mask non-edges (additive bias)
        e = e - jnp.max(e, axis=-1, keepdims=True)
        p = jnp.exp(e)                                   # non-edges underflow to exact 0
        denom = jnp.sum(p, axis=-1, keepdims=True)       # >= exp(0) (self loop always present)
        alpha = p / denom                                # exact reciprocal for validation parity
        return jnp.dot(alpha.astype(bf16), h.astype(bf16),
                       preferred_element_type=f32) + b

    x = x_ref[...]
    h1 = jnp.maximum(gat_conv(x, w1_ref[...], aux1_ref[...]), 0.0)    # conv1 + relu
    h2 = jnp.maximum(gat_conv(h1, w2_ref[...], aux2_ref[...]), 0.0)   # conv2 + relu

    # global_mean_pool as one [B, N] x [N, Fp] matmul; lane-dense [B, Fp] output
    pooled_ref[...] = jnp.dot(pool_ref[...].astype(bf16), h2.astype(bf16),
                              preferred_element_type=f32)


def pack_params(params, lane=LANE):
    """One-time (cached) packing: fold fc -> fc_final into one affine head, pack the
    small per-layer attention vectors + bias into one aux tensor per layer, and
    zero-pad every feature dimension to the 128-lane vreg width."""
    def pad_cols(a, n):
        return jnp.pad(a, ((0, 0), (0, n - a.shape[1])))

    H = params["w1"].shape[1]
    H2 = params["w2"].shape[1]

    w1 = pad_cols(params["w1"], lane)                                              # [D_in, Fp]
    aux1 = pad_cols(jnp.concatenate([params["a_src1"], params["a_dst1"],
                                     params["b1"]], axis=0), lane)                 # [3, Fp]
    w2 = jnp.pad(params["w2"], ((0, lane - H), (0, lane - H2)))                    # [Fp, Fp]
    aux2 = pad_cols(jnp.concatenate([params["a_src2"], params["a_dst2"],
                                     params["b2"]], axis=0), lane)                 # [3, Fp]

    # No activation between GAT.fc and GATModel.fc_final (dropout only) -> exact fold.
    w_head = params["w_fc"] @ params["w_ff"]                                       # [2H, 1]
    b_head = params["b_fc"] @ params["w_ff"] + params["b_ff"]                      # [1, 1]
    w_head = jnp.pad(w_head, ((0, lane - H2), (0, 0)))                             # [Fp, 1]

    return dict(w1=w1, aux1=aux1, w2=w2, aux2=aux2, w_head=w_head, b_head=b_head)


def gat_model_forward(x, adj_bias, pool, packed):
    B = pool.shape[0]
    Fp = packed["w2"].shape[1]
    # Grid-less call: the whole (tiny) working set fits in VMEM as full-array blocks.
    # TODO(synk): for realistic graph sizes, tile the attention flash-style
    #   (grid = (dst-row tiles, src-col blocks), src axis last + "arbitrary",
    #   dst-row / graph axis "parallel" for v7x's 2 TCs, online softmax in VMEM
    #   scratch, weights resident via constant index_maps, tile budgets re-derived
    #   for v7x's 64 MiB VMEM), and exploit the block-diagonal batch structure with
    #   PrefetchScalarGridSpec per-graph offsets so only [N_g, N_g] blocks are computed.
    pooled = pl.pallas_call(
        gat_model_kernel,
        out_shape=jax.ShapeDtypeStruct((B, Fp), jnp.float32),
        in_specs=[pl.BlockSpec(memory_space=pltpu.MemorySpace.VMEM)] * 7,
        out_specs=pl.BlockSpec(memory_space=pltpu.MemorySpace.VMEM),
    )(x, adj_bias, pool,
      packed["w1"], packed["aux1"], packed["w2"], packed["aux2"])

    # Folded fc -> dropout(identity) -> fc_final head on the lane-dense pooled slab
    # (padded lanes of `pooled` are exact zeros, padded rows of w_head are zeros).
    return pooled @ packed["w_head"] + packed["b_head"]                            # [B, 1]


def make_params(key, input_dim, hidden_dim=16):
    H, H2 = hidden_dim, 2 * hidden_dim
    keys = jax.random.split(key, 12)
    it = iter(keys)

    def w(shape, scale=0.1):
        return (scale * jax.random.normal(next(it), shape)).astype(jnp.float32)

    return {
        # GATConv 1: input_dim -> H
        "w1": w((input_dim, H)), "a_src1": w((1, H)), "a_dst1": w((1, H)), "b1": w((1, H)),
        # GATConv 2: H -> 2H
        "w2": w((H, H2)), "a_src2": w((1, H2)), "a_dst2": w((1, H2)), "b2": w((1, H2)),
        # GAT.fc : 2H -> H ; GATModel.fc_final : H -> 1
        "w_fc": w((H2, H)), "b_fc": w((1, H)),
        "w_ff": w((H, 1)), "b_ff": w((1, 1)),
    }


def build_graph(num_nodes, batch_assign, edges):
    """Dense GAT inputs: additive adjacency bias (undirected edges + self loops,
    bias[dst, src] = 0 on edge / -1e30 otherwise, stored bf16) and the
    global_mean_pool matrix (rows sum to 1)."""
    mask = np.eye(num_nodes, dtype=np.float32)          # add_self_loops=True
    for (i, j) in edges:
        mask[i, j] = 1.0
        mask[j, i] = 1.0
    adj_bias = np.where(mask > 0, 0.0, MASK_BIAS).astype(np.float32)
    num_graphs = int(max(batch_assign)) + 1
    P = np.zeros((num_graphs, num_nodes), dtype=np.float32)
    for n, b in enumerate(batch_assign):
        P[b, n] = 1.0
    P = P / P.sum(axis=1, keepdims=True)
    return jnp.asarray(adj_bias, dtype=jnp.bfloat16), jnp.asarray(P)


if __name__ == "__main__":
    B = 2          # graphs in the batch
    D_IN = 8       # node feature dim (GATModel input_dim)
    HID = 16       # hidden_dim (GAT is built with hidden_dim=16 -> conv2 out = 32)
    N = 8          # total nodes (4 per graph)

    key = jax.random.PRNGKey(0)
    k_params, k_nodes = jax.random.split(key, 2)

    params = make_params(k_params, D_IN, HID)
    packed = pack_params(params)     # folded / packed / lane-padded once, reused across calls

    x = (0.1 * jax.random.normal(k_nodes, (N, D_IN))).astype(jnp.float32)
    batch_assign = [0, 0, 0, 0, 1, 1, 1, 1]
    edges = [(0, 1), (1, 2), (2, 3), (4, 5), (5, 6), (6, 7)]
    adj_bias, pool = build_graph(N, batch_assign, edges)

    out = gat_model_forward(x, adj_bias, pool, packed)
    out = jax.block_until_ready(out)
    assert out.shape == (B, 1)
    print("KERNEL_OK")
</pallas_src>

<mosaic_0001>
module attributes {stable_mosaic.version = 11 : i64} {
  func.func @gat_model_kernel(%arg0: memref<8x8xf32, #tpu.memory_space<vmem>>, %arg1: memref<8x8xbf16, #tpu.memory_space<vmem>>, %arg2: memref<2x8xf32, #tpu.memory_space<vmem>>, %arg3: memref<8x128xf32, #tpu.memory_space<vmem>>, %arg4: memref<3x128xf32, #tpu.memory_space<vmem>>, %arg5: memref<128x128xf32, #tpu.memory_space<vmem>>, %arg6: memref<3x128xf32, #tpu.memory_space<vmem>>, %arg7: memref<2x128xf32, #tpu.memory_space<vmem>>) attributes {dimension_semantics = [], scalar_prefetch = 0 : i64, scratch_operands = 0 : i64, tpu.core_type = #tpu.core_type<tc>} {
    %c0 = arith.constant 0 : index
    %c0_0 = arith.constant 0 : index
    %0 = vector.load %arg1[%c0, %c0_0] : memref<8x8xbf16, #tpu.memory_space<vmem>>, vector<8x8xbf16>
    %1 = arith.extf %0 : vector<8x8xbf16> to vector<8x8xf32>
    %c0_1 = arith.constant 0 : index
    %c0_2 = arith.constant 0 : index
    %2 = vector.load %arg0[%c0_1, %c0_2] : memref<8x8xf32, #tpu.memory_space<vmem>>, vector<8x8xf32>
    %c0_3 = arith.constant 0 : index
    %c0_4 = arith.constant 0 : index
    %3 = vector.load %arg3[%c0_3, %c0_4] : memref<8x128xf32, #tpu.memory_space<vmem>>, vector<8x128xf32>
    %c0_5 = arith.constant 0 : index
    %c0_6 = arith.constant 0 : index
    %4 = vector.load %arg4[%c0_5, %c0_6] : memref<3x128xf32, #tpu.memory_space<vmem>>, vector<3x128xf32>
    %5 = arith.truncf %2 : vector<8x8xf32> to vector<8x8xbf16>
    %6 = arith.truncf %3 : vector<8x128xf32> to vector<8x128xbf16>
    %cst = arith.constant dense<0.000000e+00> : vector<8x128xf32>
    %7 = tpu.matmul %5, %6, %cst {dimension_numbers = #tpu.dot_dimension_numbers<[1], [0], [0], [1], [0, 0, 1, 1], [], []>} : vector<8x8xbf16>, vector<8x128xbf16>, vector<8x128xf32> -> vector<8x128xf32>
    %8 = vector.extract_strided_slice %4 {offsets = [0, 0], sizes = [1, 128], strides = [1, 1]} : vector<3x128xf32> to vector<1x128xf32>
    %9 = vector.extract_strided_slice %4 {offsets = [1, 0], sizes = [1, 128], strides = [1, 1]} : vector<3x128xf32> to vector<1x128xf32>
    %10 = vector.extract_strided_slice %4 {offsets = [2, 0], sizes = [1, 128], strides = [1, 1]} : vector<3x128xf32> to vector<1x128xf32>
    %11 = vector.broadcast %9 : vector<1x128xf32> to vector<8x128xf32>
    %12 = arith.mulf %7, %11 : vector<8x128xf32>
    %cst_7 = arith.constant dense<0.000000e+00> : vector<8xf32>
    %13 = vector.multi_reduction <add>, %12, %cst_7 [1] : vector<8x128xf32> to vector<8xf32>
    %14 = vector.shape_cast %13 : vector<8xf32> to vector<8x1xf32>
    %cst_8 = arith.constant dense<0.000000e+00> : vector<1x8xf32>
    %15 = tpu.matmul %8, %7, %cst_8 {dimension_numbers = #tpu.dot_dimension_numbers<[1], [1], [0], [0], [0, 0, 1, 0], [], []>} : vector<1x128xf32>, vector<8x128xf32>, vector<1x8xf32> -> vector<1x8xf32>
    %16 = vector.broadcast %14 : vector<8x1xf32> to vector<8x8xf32>
    %17 = vector.broadcast %15 : vector<1x8xf32> to vector<8x8xf32>
    %18 = arith.addf %16, %17 : vector<8x8xf32>
    %cst_9 = arith.constant 0.000000e+00 : f32
    %19 = vector.broadcast %cst_9 : f32 to vector<8x8xf32>
    %20 = arith.cmpf ogt, %18, %19 : vector<8x8xf32>
    %cst_10 = arith.constant 2.000000e-01 : f32
    %21 = vector.broadcast %cst_10 : f32 to vector<8x8xf32>
    %22 = arith.mulf %21, %18 : vector<8x8xf32>
    %23 = arith.select %20, %18, %22 : vector<8x8xi1>, vector<8x8xf32>
    %24 = arith.addf %23, %1 : vector<8x8xf32>
    %cst_11 = arith.constant dense<0xFF800000> : vector<8xf32>
    %25 = vector.multi_reduction <maximumf>, %24, %cst_11 [1] : vector<8x8xf32> to vector<8xf32>
    %26 = vector.shape_cast %25 : vector<8xf32> to vector<8x1xf32>
    %27 = vector.broadcast %26 : vector<8x1xf32> to vector<8x8xf32>
    %28 = arith.subf %24, %27 : vector<8x8xf32>
    %29 = math.exp %28 : vector<8x8xf32>
    %cst_12 = arith.constant dense<0.000000e+00> : vector<8xf32>
    %30 = vector.multi_reduction <add>, %29, %cst_12 [1] : vector<8x8xf32> to vector<8xf32>
    %31 = vector.shape_cast %30 : vector<8xf32> to vector<8x1xf32>
    %32 = vector.broadcast %31 : vector<8x1xf32> to vector<8x8xf32>
    %33 = arith.divf %29, %32 : vector<8x8xf32>
    %34 = arith.truncf %33 : vector<8x8xf32> to vector<8x8xbf16>
    %35 = arith.truncf %7 : vector<8x128xf32> to vector<8x128xbf16>
    %cst_13 = arith.constant dense<0.000000e+00> : vector<8x128xf32>
    %36 = tpu.matmul %34, %35, %cst_13 {dimension_numbers = #tpu.dot_dimension_numbers<[1], [0], [0], [1], [0, 0, 1, 1], [], []>} : vector<8x8xbf16>, vector<8x128xbf16>, vector<8x128xf32> -> vector<8x128xf32>
    %37 = vector.broadcast %10 : vector<1x128xf32> to vector<8x128xf32>
    %38 = arith.addf %36, %37 : vector<8x128xf32>
    %cst_14 = arith.constant 0.000000e+00 : f32
    %39 = vector.broadcast %cst_14 : f32 to vector<8x128xf32>
    %40 = arith.maximumf %38, %39 : vector<8x128xf32>
    %c0_15 = arith.constant 0 : index
    %c0_16 = arith.constant 0 : index
    %41 = vector.load %arg5[%c0_15, %c0_16] : memref<128x128xf32, #tpu.memory_space<vmem>>, vector<128x128xf32>
    %c0_17 = arith.constant 0 : index
    %c0_18 = arith.constant 0 : index
    %42 = vector.load %arg6[%c0_17, %c0_18] : memref<3x128xf32, #tpu.memory_space<vmem>>, vector<3x128xf32>
    %43 = arith.truncf %40 : vector<8x128xf32> to vector<8x128xbf16>
    %44 = arith.truncf %41 : vector<128x128xf32> to vector<128x128xbf16>
    %cst_19 = arith.constant dense<0.000000e+00> : vector<8x128xf32>
    %45 = tpu.matmul %43, %44, %cst_19 {dimension_numbers = #tpu.dot_dimension_numbers<[1], [0], [0], [1], [0, 0, 1, 1], [], []>} : vector<8x128xbf16>, vector<128x128xbf16>, vector<8x128xf32> -> vector<8x128xf32>
    %46 = vector.extract_strided_slice %42 {offsets = [0, 0], sizes = [1, 128], strides = [1, 1]} : vector<3x128xf32> to vector<1x128xf32>
    %47 = vector.extract_strided_slice %42 {offsets = [1, 0], sizes = [1, 128], strides = [1, 1]} : vector<3x128xf32> to vector<1x128xf32>
    %48 = vector.extract_strided_slice %42 {offsets = [2, 0], sizes = [1, 128], strides = [1, 1]} : vector<3x128xf32> to vector<1x128xf32>
    %49 = vector.broadcast %47 : vector<1x128xf32> to vector<8x128xf32>
    %50 = arith.mulf %45, %49 : vector<8x128xf32>
    %cst_20 = arith.constant dense<0.000000e+00> : vector<8xf32>
    %51 = vector.multi_reduction <add>, %50, %cst_20 [1] : vector<8x128xf32> to vector<8xf32>
    %52 = vector.shape_cast %51 : vector<8xf32> to vector<8x1xf32>
    %cst_21 = arith.constant dense<0.000000e+00> : vector<1x8xf32>
    %53 = tpu.matmul %46, %45, %cst_21 {dimension_numbers = #tpu.dot_dimension_numbers<[1], [1], [0], [0], [0, 0, 1, 0], [], []>} : vector<1x128xf32>, vector<8x128xf32>, vector<1x8xf32> -> vector<1x8xf32>
    %54 = vector.broadcast %52 : vector<8x1xf32> to vector<8x8xf32>
    %55 = vector.broadcast %53 : vector<1x8xf32> to vector<8x8xf32>
    %56 = arith.addf %54, %55 : vector<8x8xf32>
    %cst_22 = arith.constant 0.000000e+00 : f32
    %57 = vector.broadcast %cst_22 : f32 to vector<8x8xf32>
    %58 = arith.cmpf ogt, %56, %57 : vector<8x8xf32>
    %cst_23 = arith.constant 2.000000e-01 : f32
    %59 = vector.broadcast %cst_23 : f32 to vector<8x8xf32>
    %60 = arith.mulf %59, %56 : vector<8x8xf32>
    %61 = arith.select %58, %56, %60 : vector<8x8xi1>, vector<8x8xf32>
    %62 = arith.addf %61, %1 : vector<8x8xf32>
    %cst_24 = arith.constant dense<0xFF800000> : vector<8xf32>
    %63 = vector.multi_reduction <maximumf>, %62, %cst_24 [1] : vector<8x8xf32> to vector<8xf32>
    %64 = vector.shape_cast %63 : vector<8xf32> to vector<8x1xf32>
    %65 = vector.broadcast %64 : vector<8x1xf32> to vector<8x8xf32>
    %66 = arith.subf %62, %65 : vector<8x8xf32>
    %67 = math.exp %66 : vector<8x8xf32>
    %cst_25 = arith.constant dense<0.000000e+00> : vector<8xf32>
    %68 = vector.multi_reduction <add>, %67, %cst_25 [1] : vector<8x8xf32> to vector<8xf32>
    %69 = vector.shape_cast %68 : vector<8xf32> to vector<8x1xf32>
    %70 = vector.broadcast %69 : vector<8x1xf32> to vector<8x8xf32>
    %71 = arith.divf %67, %70 : vector<8x8xf32>
    %72 = arith.truncf %71 : vector<8x8xf32> to vector<8x8xbf16>
    %73 = arith.truncf %45 : vector<8x128xf32> to vector<8x128xbf16>
    %cst_26 = arith.constant dense<0.000000e+00> : vector<8x128xf32>
    %74 = tpu.matmul %72, %73, %cst_26 {dimension_numbers = #tpu.dot_dimension_numbers<[1], [0], [0], [1], [0, 0, 1, 1], [], []>} : vector<8x8xbf16>, vector<8x128xbf16>, vector<8x128xf32> -> vector<8x128xf32>
    %75 = vector.broadcast %48 : vector<1x128xf32> to vector<8x128xf32>
    %76 = arith.addf %74, %75 : vector<8x128xf32>
    %cst_27 = arith.constant 0.000000e+00 : f32
    %77 = vector.broadcast %cst_27 : f32 to vector<8x128xf32>
    %78 = arith.maximumf %76, %77 : vector<8x128xf32>
    %c0_28 = arith.constant 0 : index
    %c0_29 = arith.constant 0 : index
    %79 = vector.load %arg2[%c0_28, %c0_29] : memref<2x8xf32, #tpu.memory_space<vmem>>, vector<2x8xf32>
    %80 = arith.truncf %79 : vector<2x8xf32> to vector<2x8xbf16>
    %81 = arith.truncf %78 : vector<8x128xf32> to vector<8x128xbf16>
    %cst_30 = arith.constant dense<0.000000e+00> : vector<2x128xf32>
    %82 = tpu.matmul %80, %81, %cst_30 {dimension_numbers = #tpu.dot_dimension_numbers<[1], [0], [0], [1], [0, 0, 1, 1], [], []>} : vector<2x8xbf16>, vector<8x128xbf16>, vector<2x128xf32> -> vector<2x128xf32>
    %c0_31 = arith.constant 0 : index
    %c0_32 = arith.constant 0 : index
    %83 = vector.load %arg7[%c0_31, %c0_32] : memref<2x128xf32, #tpu.memory_space<vmem>>, vector<2x128xf32>
    tpu.vector_store %arg7[%c0_31, %c0_32], %82 {strides = array<i32>} : memref<2x128xf32, #tpu.memory_space<vmem>>, vector<2x128xf32>,
    return
  }
}

</mosaic_0001>

<llo_original>
// kernel: tpu_custom_call.1
$region0: #{tpu_custom_call.1}
  #allocation0 [shape = 'u32[]', space=smem, size = 0x4, offset = 0x4, fixed_abs, tag = 'smem constant byte address 0x4 - core index']
  #allocation1 [shape = 'u32[144,128]{1,0:T(1,128)}', space=vmem, size = 0x12000, scoped, tag = 'internal scratch']
  %s0 = inlined_call_operand.hbm [shape: f32[8,8], index: 0, kind: input, shape index: {}]
  %s1 = inlined_call_operand.hbm [shape: bf16[8,8], index: 1, kind: input, shape index: {}]
  %s2 = inlined_call_operand.vmem [shape: f32[2,8], index: 2, kind: input, shape index: {}]
  %s3 = inlined_call_operand.vmem [shape: f32[8,128], index: 3, kind: input, shape index: {}]
  %s4 = inlined_call_operand.vmem [shape: f32[3,128], index: 4, kind: input, shape index: {}]
  %s5 = inlined_call_operand.hbm [shape: f32[128,128], index: 5, kind: input, shape index: {}]
  %s6 = inlined_call_operand.vmem [shape: f32[3,128], index: 6, kind: input, shape index: {}]
  %s7 = inlined_call_operand.hbm [shape: f32[2,128], index: 7, kind: output, shape index: {}]
  %s8 = sld [smem:[#allocation0]]
  $region50: #{tpu_custom_call.1} parent=0
    _
  %s10 = ssub.s32 1, %s8
  %s11 = scalar_select 0, %s10, %s8
  $region1: #{tpu_custom_call.1} parent=0
    #allocation2 [shape = 'u8[4096]{0}', space=vmem, size = 0x1000, scoped, tag = 'input window, operand 0, single buffered']
    #allocation3 [shape = 's32[1]{0}', space=sflag, size = 0x4, scoped, tag = 'scoped memory for tpu_custom_call.1']
    #allocation4 [shape = 's32[1]{0}', space=sflag, size = 0x4, scoped, tag = 'scoped memory for tpu_custom_call.1']
    #allocation5 [shape = 'u8[2048]{0}', space=vmem, size = 0x800, scoped, tag = 'input window, operand 1, single buffered']
    #allocation6 [shape = 's32[1]{0}', space=sflag, size = 0x4, scoped, tag = 'scoped memory for tpu_custom_call.1']
    #allocation7 [shape = 'u8[65536]{0}', space=vmem, size = 0x10000, scoped, tag = 'input window, operand 5, single buffered']
    #allocation8 [shape = 'u8[1024]{0}', space=vmem, size = 0x400, scoped, tag = 'output window, operand 0, single buffered']
    %12 = vsyncpa [#allocation3], 0
    %13 = vsyncpa [#allocation6], 0
    %14 = vsyncpa [#allocation4], 0
    // Predicated region
    $region2: #{tpu_custom_call.1} parent=1 // pred_check
      _
    $region3: #{tpu_custom_call.1} parent=1 // pred_check_branch
      %16 = sbr.rel (0) target = $region5
    $region4: #{tpu_custom_call.1} parent=1 // pred_region
      %s18 = ssub.s32 128, 128
      %19 = vsyncadd [#allocation3], %s18
      %s21 = sshll.u32 [#allocation2], 4
      %s22 = int_to_ptr.vmem [resolvable:$true] %s21
      %24 = dma.hbm_to_vmem [thread:$0]  %s0, 128, %s22, [#allocation3]
    $region5: #{tpu_custom_call.1} parent=1 // pred_fallthru
      _
    // Predicated region
    $region6: #{tpu_custom_call.1} parent=1 // pred_check
      _
    $region7: #{tpu_custom_call.1} parent=1 // pred_check_branch
      %26 = sbr.rel (0) target = $region9
    $region8: #{tpu_custom_call.1} parent=1 // pred_region
      %s28 = ssub.s32 64, 64
      %29 = vsyncadd [#allocation6], %s28
      %s31 = sshll.u32 [#allocation5], 4
      %s32 = int_to_ptr.vmem [resolvable:$true] %s31
      %34 = dma.hbm_to_vmem [thread:$0]  %s1, 64, %s32, [#allocation6]
    $region9: #{tpu_custom_call.1} parent=1 // pred_fallthru
      _
    // Predicated region
    $region10: #{tpu_custom_call.1} parent=1 // pred_check
      _
    $region11: #{tpu_custom_call.1} parent=1 // pred_check_branch
      %36 = sbr.rel (0) target = $region13
    $region12: #{tpu_custom_call.1} parent=1 // pred_region
      _
    $region13: #{tpu_custom_call.1} parent=1 // pred_fallthru
      _
    // Predicated region
    $region14: #{tpu_custom_call.1} parent=1 // pred_check
      _
    $region15: #{tpu_custom_call.1} parent=1 // pred_check_branch
      %38 = sbr.rel (0) target = $region17
    $region16: #{tpu_custom_call.1} parent=1 // pred_region
      _
    $region17: #{tpu_custom_call.1} parent=1 // pred_fallthru
      _
    // Predicated region
    $region18: #{tpu_custom_call.1} parent=1 // pred_check
      _
    $region19: #{tpu_custom_call.1} parent=1 // pred_check_branch
      %40 = sbr.rel (0) target = $region21
    $region20: #{tpu_custom_call.1} parent=1 // pred_region
      _
    $region21: #{tpu_custom_call.1} parent=1 // pred_fallthru
      _
    // Predicated region
    $region22: #{tpu_custom_call.1} parent=1 // pred_check
      _
    $region23: #{tpu_custom_call.1} parent=1 // pred_check_branch
      %42 = sbr.rel (0) target = $region25
    $region24: #{tpu_custom_call.1} parent=1 // pred_region
      %s44 = ssub.s32 2048, 2048
      %45 = vsyncadd [#allocation6], %s44
      %s46 = sshll.u32 [#allocation7], 4
      %s47 = int_to_ptr.vmem [resolvable:$true] %s46
      %52 = dma.hbm_to_vmem [thread:$0]  %s5, 2048, %s47, [#allocation6], 128, 128, 8
    $region25: #{tpu_custom_call.1} parent=1 // pred_fallthru
      _
    // Predicated region
    $region26: #{tpu_custom_call.1} parent=1 // pred_check
      _
    $region27: #{tpu_custom_call.1} parent=1 // pred_check_branch
      %54 = sbr.rel (0) target = $region29
    $region28: #{tpu_custom_call.1} parent=1 // pred_region
      _
    $region29: #{tpu_custom_call.1} parent=1 // pred_fallthru
      _
    // Predicated region
    $region30: #{tpu_custom_call.1} parent=1 // pred_check
      _
    $region31: #{tpu_custom_call.1} parent=1 // pred_check_branch
      %56 = sbr.rel (0) target = $region33
    $region32: #{tpu_custom_call.1} parent=1 // pred_region
      %57 = dma.done [#allocation3], 128
    $region33: #{tpu_custom_call.1} parent=1 // pred_fallthru
      _
    // Predicated region
    $region34: #{tpu_custom_call.1} parent=1 // pred_check
      _
    $region35: #{tpu_custom_call.1} parent=1 // pred_check_branch
      %59 = sbr.rel (0) target = $region37
    $region36: #{tpu_custom_call.1} parent=1 // pred_region
      %60 = dma.done [#allocation6], 64
    $region37: #{tpu_custom_call.1} parent=1 // pred_fallthru
      _
    // Predicated region
    $region38: #{tpu_custom_call.1} parent=1 // pred_check
      _
    $region39: #{tpu_custom_call.1} parent=1 // pred_check_branch
      %62 = sbr.rel (0) target = $region41
    $region40: #{tpu_custom_call.1} parent=1 // pred_region
      %63 = dma.done [#allocation6], 2048
    $region41: #{tpu_custom_call.1} parent=1 // pred_fallthru
      _
    %v65 = vld [vmem:[#allocation5] sm:$0xf]
    %v66 = vunpack.c.l.bf16 %v65
    %v67 = vld [vmem:[#allocation2] sm:$0xff]
    %v68 = vld [vmem:[%s3] sm:$0xff]
    %v69 = vld [vmem:[%s4] sm:$0x7]
    %v70 = vpack.c.bf16 %v67, %v67
    %v71 = vpack.c.bf16 %v68, %v68
    %vm72 = vcmask 64512
    %v74 = vsel %vm72, %v70, 0
    %vm76 = vcmask 1043456
    %v78 = vsel %vm76, %v71, 0
    %80 = vmatprep.subr.bf16.mxu0 0
    %81 = vmatpush1.bf16.msra.mxu0 %v78
    %82 = vmatprep.subr.bf16.mxu0 0
    %83 = vmatpush1.bf16.msra.mxu0 0
    %84 = vmatprep.subr.bf16.mxu0 0
    %85 = vmatpush1.bf16.msra.mxu0 0
    %86 = vmatprep.subr.bf16.mxu0 0
    %87 = vmatpush1.bf16.msra.mxu0 0
    %88 = vmatprep.subr.bf16.mxu0 0
    %89 = vmatpush1.bf16.msra.mxu0 0
    %90 = vmatprep.subr.bf16.mxu0 0
    %91 = vmatpush1.bf16.msra.mxu0 0
    %92 = vmatprep.subr.bf16.mxu0 0
    %93 = vmatpush1.bf16.msra.mxu0 0
    %94 = vmatprep.subr.bf16.mxu0 0
    %95 = vmatpush1.bf16.msra.mxu0 0
    %96 = vmatprep.subr.bf16.mxu0 0
    %97 = vmatpush1.bf16.msra.mxu0 0
    %98 = vmatprep.subr.bf16.mxu0 0
    %99 = vmatpush1.bf16.msra.mxu0 0
    %100 = vmatprep.subr.bf16.mxu0 0
    %101 = vmatpush1.bf16.msra.mxu0 0
    %102 = vmatprep.subr.bf16.mxu0 0
    %103 = vmatpush1.bf16.msra.mxu0 0
    %104 = vmatprep.subr.bf16.mxu0 0
    %105 = vmatpush1.bf16.msra.mxu0 0
    %106 = vmatprep.subr.bf16.mxu0 0
    %107 = vmatpush1.bf16.msra.mxu0 0
    %108 = vmatprep.subr.bf16.mxu0 0
    %109 = vmatpush1.bf16.msra.mxu0 0
    %110 = vmatprep.subr.bf16.mxu0 0
    %111 = vmatpush1.bf16.msra.mxu0 0
    %112 = vmatprep.mubr.bf16.mxu0 0
    %113 = vmatmul.mubr.bf16.gmra.mrb[0].mxu0 %v74
    %v114 = vpop.f32.mrb[0].mxu0
    %v115 = vadd.f32 0.0, %v114
    %v116 = vpop.f32.mrb[0].mxu0
    %v117 = vpop.f32.mrb[0].mxu0
    %v118 = vpop.f32.mrb[0].mxu0
    %119 = vdwg.mxu0
    %v120 = vlaneseq
    %v121 = vshrl.u32 %v120, 7
    %v122 = vsub.s32 1, %v121
    %v123 = vrot.slane %v69, %v122
    %v124 = vmul.f32 %v115, %v123
    %125 = vadd.xlane.f32.xlu0 %v124
    %v126 = vpop.xlane.xlu0 %125
    %127 = vmatprep.subr.mxu0 0.0
    %128 = vmatpush1.xpose.msra.mxu0 %v115
    %129 = vmatprep.subr.mxu0 0.0
    %130 = vmatpush1.xpose.msra.mxu0 0.0
    %131 = vmatprep.subr.mxu0 0.0
    %132 = vmatpush1.xpose.msra.mxu0 0.0
    %133 = vmatprep.subr.mxu0 0.0
    %134 = vmatpush1.xpose.msra.mxu0 0.0
    %135 = vmatprep.subr.mxu0 0.0
    %136 = vmatpush1.xpose.msra.mxu0 0.0
    %137 = vmatprep.subr.mxu0 0.0
    %138 = vmatpush1.xpose.msra.mxu0 0.0
    %139 = vmatprep.subr.mxu0 0.0
    %140 = vmatpush1.xpose.msra.mxu0 0.0
    %141 = vmatprep.subr.mxu0 0.0
    %142 = vmatpush1.xpose.msra.mxu0 0.0
    %143 = vmatprep.subr.mxu0 0.0
    %144 = vmatpush1.xpose.msra.mxu0 0.0
    %145 = vmatprep.subr.mxu0 0.0
    %146 = vmatpush1.xpose.msra.mxu0 0.0
    %147 = vmatprep.subr.mxu0 0.0
    %148 = vmatpush1.xpose.msra.mxu0 0.0
    %149 = vmatprep.subr.mxu0 0.0
    %150 = vmatpush1.xpose.msra.mxu0 0.0
    %151 = vmatprep.subr.mxu0 0.0
    %152 = vmatpush1.xpose.msra.mxu0 0.0
    %153 = vmatprep.subr.mxu0 0.0
    %154 = vmatpush1.xpose.msra.mxu0 0.0
    %155 = vmatprep.subr.mxu0 0.0
    %156 = vmatpush1.xpose.msra.mxu0 0.0
    %157 = vmatprep.subr.mxu0 0.0
    %158 = vmatpush1.xpose.msra.mxu0 0.0
    %159 = vmatprep.subr.mxu0 0.0
    %160 = vmatpush1.xpose.msra.mxu0 0.0
    %161 = vmatprep.subr.mxu0 0.0
    %162 = vmatpush1.xpose.msra.mxu0 0.0
    %163 = vmatprep.subr.mxu0 0.0
    %164 = vmatpush1.xpose.msra.mxu0 0.0
    %165 = vmatprep.subr.mxu0 0.0
    %166 = vmatpush1.xpose.msra.mxu0 0.0
    %167 = vmatprep.subr.mxu0 0.0
    %168 = vmatpush1.xpose.msra.mxu0 0.0
    %169 = vmatprep.subr.mxu0 0.0
    %170 = vmatpush1.xpose.msra.mxu0 0.0
    %171 = vmatprep.subr.mxu0 0.0
    %172 = vmatpush1.xpose.msra.mxu0 0.0
    %173 = vmatprep.subr.mxu0 0.0
    %174 = vmatpush1.xpose.msra.mxu0 0.0
    %175 = vmatprep.subr.mxu0 0.0
    %176 = vmatpush1.xpose.msra.mxu0 0.0
    %177 = vmatprep.subr.mxu0 0.0
    %178 = vmatpush1.xpose.msra.mxu0 0.0
    %179 = vmatprep.subr.mxu0 0.0
    %180 = vmatpush1.xpose.msra.mxu0 0.0
    %181 = vmatprep.subr.mxu0 0.0
    %182 = vmatpush1.xpose.msra.mxu0 0.0
    %183 = vmatprep.subr.mxu0 0.0
    %184 = vmatpush1.xpose.msra.mxu0 0.0
    %185 = vmatprep.subr.mxu0 0.0
    %186 = vmatpush1.xpose.msra.mxu0 0.0
    %187 = vmatprep.subr.mxu0 0.0
    %188 = vmatpush1.xpose.msra.mxu0 0.0
    %189 = vmatprep.subr.mxu0 0.0
    %190 = vmatpush1.xpose.msra.mxu0 0.0
    %191 = vmatprep.mubr.f32.mxu0 0.0
    %192 = vmatmul.mubr.f32.gmra.mrb[0].mxu0 %v69
    %v193 = vpop.f32.mrb[0].mxu0
    %v194 = vadd.f32 0.0, %v193
    %v195 = vpop.f32.mrb[0].mxu0
    %196 = vdwg.mxu0
    %v197 = vlaneseq
    %v198 = vshrl.u32 %v197, 7
    %v199 = vsub.s32 0, %v198
    %v200 = vrot.slane %v194, %v199
    %v201 = vadd.f32 %v126, %v200
    %vm202 = vcmp.gt.f32.partialorder %v201, 0.0
    %v203 = vmul.f32 %v201, 0.2
    %v204 = vsel %vm202, %v201, %v203
    %v205 = vadd.f32 %v204, %v66
    %v206 = vsel %vm72, %v205, -inf
    %207 = vmax.xlane.f32.xlu0 %v206
    %v208 = vpop.xlane.xlu0 %207
    %v209 = vsub.f32 %v205, %v208
    %v210 = vmul.f32 %v209, 1.442695
    %v211 = vpow.pop %v210
    %v212 = vsel %vm72, %v211, 0.0
    %213 = vadd.xlane.f32.xlu0 %v212
    %v214 = vpop.xlane.xlu0 %213
    %v215 = vrcp.pop %v214
    %v216 = vmul.f32 %v211, %v215
    %v217 = vpack.c.bf16 %v216, %v216
    %v218 = vpack.c.bf16 %v115, %v115
    %v219 = vlaneseq
    %v220 = vshrl.u32 %v219, 7
    %v221 = vsub.s32 2, %v220
    %v222 = vrot.slane %v69, %v221
    %v224 = vsel %vm72, %v217, 0
    %v227 = vsel %vm76, %v218, 0
    %229 = vmatprep.subr.bf16.mxu0 0
    %230 = vmatpush1.bf16.msra.mxu0 %v227
    %231 = vmatprep.subr.bf16.mxu0 0
    %232 = vmatpush1.bf16.msra.mxu0 0
    %233 = vmatprep.subr.bf16.mxu0 0
    %234 = vmatpush1.bf16.msra.mxu0 0
    %235 = vmatprep.subr.bf16.mxu0 0
    %236 = vmatpush1.bf16.msra.mxu0 0
    %237 = vmatprep.subr.bf16.mxu0 0
    %238 = vmatpush1.bf16.msra.mxu0 0
    %239 = vmatprep.subr.bf16.mxu0 0
    %240 = vmatpush1.bf16.msra.mxu0 0
    %241 = vmatprep.subr.bf16.mxu0 0
    %242 = vmatpush1.bf16.msra.mxu0 0
    %243 = vmatprep.subr.bf16.mxu0 0
    %244 = vmatpush1.bf16.msra.mxu0 0
    %245 = vmatprep.subr.bf16.mxu0 0
    %246 = vmatpush1.bf16.msra.mxu0 0
    %247 = vmatprep.subr.bf16.mxu0 0
    %248 = vmatpush1.bf16.msra.mxu0 0
    %249 = vmatprep.subr.bf16.mxu0 0
    %250 = vmatpush1.bf16.msra.mxu0 0
    %251 = vmatprep.subr.bf16.mxu0 0
    %252 = vmatpush1.bf16.msra.mxu0 0
    %253 = vmatprep.subr.bf16.mxu0 0
    %254 = vmatpush1.bf16.msra.mxu0 0
    %255 = vmatprep.subr.bf16.mxu0 0
    %256 = vmatpush1.bf16.msra.mxu0 0
    %257 = vmatprep.subr.bf16.mxu0 0
    %258 = vmatpush1.bf16.msra.mxu0 0
    %259 = vmatprep.subr.bf16.mxu0 0
    %260 = vmatpush1.bf16.msra.mxu0 0
    %261 = vmatprep.mubr.bf16.mxu0 0
    %262 = vmatmul.mubr.bf16.gmra.mrb[0].mxu0 %v224
    %v263 = vpop.f32.mrb[0].mxu0
    %v264 = vadd.f32 %v222, %v263
    %v265 = vpop.f32.mrb[0].mxu0
    %v266 = vpop.f32.mrb[0].mxu0
    %v267 = vpop.f32.mrb[0].mxu0
    %268 = vdwg.mxu0
    %v269 = vmax.f32 %v264, 0.0
    %v270 = vld [vmem:[#allocation7] sm:$0xff]
    %v271 = vld [vmem:[#allocation7 + $0x8] sm:$0xff]
    %v272 = vld [vmem:[#allocation7 + $0x10] sm:$0xff]
    %v273 = vld [vmem:[#allocation7 + $0x18] sm:$0xff]
    %v274 = vld [vmem:[#allocation7 + $0x20] sm:$0xff]
    %v275 = vld [vmem:[#allocation7 + $0x28] sm:$0xff]
    %v276 = vld [vmem:[#allocation7 + $0x30] sm:$0xff]
    %v277 = vld [vmem:[#allocation7 + $0x38] sm:$0xff]
    %v278 = vld [vmem:[#allocation7 + $0x40] sm:$0xff]
    %v279 = vld [vmem:[#allocation7 + $0x48] sm:$0xff]
    %v280 = vld [vmem:[#allocation7 + $0x50] sm:$0xff]
    %v281 = vld [vmem:[#allocation7 + $0x58] sm:$0xff]
    %v282 = vld [vmem:[#allocation7 + $0x60] sm:$0xff]
    %v283 = vld [vmem:[#allocation7 + $0x68] sm:$0xff]
    %v284 = vld [vmem:[#allocation7 + $0x70] sm:$0xff]
    %v285 = vld [vmem:[#allocation7 + $0x78] sm:$0xff]
    %v286 = vld [vmem:[%s6] sm:$0x7]
    %v287 = vpack.c.bf16 %v269, %v269
    %v288 = vpack.c.bf16 %v271, %v270
    %v289 = vpack.c.bf16 %v273, %v272
    %v290 = vpack.c.bf16 %v275, %v274
    %v291 = vpack.c.bf16 %v277, %v276
    %v292 = vpack.c.bf16 %v279, %v278
    %v293 = vpack.c.bf16 %v281, %v280
    %v294 = vpack.c.bf16 %v283, %v282
    %v295 = vpack.c.bf16 %v285, %v284
    %296 = vmatprep.subr.bf16.mxu0 0
    %297 = vmatpush1.bf16.msra.mxu0 %v288
    %298 = vmatprep.subr.bf16.mxu0 0
    %299 = vmatpush1.bf16.msra.mxu0 %v289
    %300 = vmatprep.subr.bf16.mxu0 0
    %301 = vmatpush1.bf16.msra.mxu0 %v290
    %302 = vmatprep.subr.bf16.mxu0 0
    %303 = vmatpush1.bf16.msra.mxu0 %v291
    %304 = vmatprep.subr.bf16.mxu0 0
    %305 = vmatpush1.bf16.msra.mxu0 %v292
    %306 = vmatprep.subr.bf16.mxu0 0
    %307 = vmatpush1.bf16.msra.mxu0 %v293
    %308 = vmatprep.subr.bf16.mxu0 0
    %309 = vmatpush1.bf16.msra.mxu0 %v294
    %310 = vmatprep.subr.bf16.mxu0 0
    %311 = vmatpush1.bf16.msra.mxu0 %v295
    %312 = vmatprep.subr.bf16.mxu0 0
    %313 = vmatpush1.bf16.msra.mxu0 0
    %314 = vmatprep.subr.bf16.mxu0 0
    %315 = vmatpush1.bf16.msra.mxu0 0
    %316 = vmatprep.subr.bf16.mxu0 0
    %317 = vmatpush1.bf16.msra.mxu0 0
    %318 = vmatprep.subr.bf16.mxu0 0
    %319 = vmatpush1.bf16.msra.mxu0 0
    %320 = vmatprep.subr.bf16.mxu0 0
    %321 = vmatpush1.bf16.msra.mxu0 0
    %322 = vmatprep.subr.bf16.mxu0 0
    %323 = vmatpush1.bf16.msra.mxu0 0
    %324 = vmatprep.subr.bf16.mxu0 0
    %325 = vmatpush1.bf16.msra.mxu0 0
    %326 = vmatprep.subr.bf16.mxu0 0
    %327 = vmatpush1.bf16.msra.mxu0 0
    %328 = vmatprep.mubr.bf16.mxu0 0
    %329 = vmatmul.mubr.bf16.gmra.mrb[0].mxu0 %v287
    %v330 = vpop.f32.mrb[0].mxu0
    %v331 = vadd.f32 0.0, %v330
    %v332 = vpop.f32.mrb[0].mxu0
    %v333 = vpop.f32.mrb[0].mxu0
    %v334 = vpop.f32.mrb[0].mxu0
    %335 = vdwg.mxu0
    %v336 = vlaneseq
    %v337 = vshrl.u32 %v336, 7
    %v338 = vsub.s32 1, %v337
    %v339 = vrot.slane %v286, %v338
    %v340 = vmul.f32 %v331, %v339
    %341 = vadd.xlane.f32.xlu0 %v340
    %v342 = vpop.xlane.xlu0 %341
    %343 = vmatprep.subr.mxu0 0.0
    %344 = vmatpush1.xpose.msra.mxu0 %v331
    %345 = vmatprep.subr.mxu0 0.0
    %346 = vmatpush1.xpose.msra.mxu0 0.0
    %347 = vmatprep.subr.mxu0 0.0
    %348 = vmatpush1.xpose.msra.mxu0 0.0
    %349 = vmatprep.subr.mxu0 0.0
    %350 = vmatpush1.xpose.msra.mxu0 0.0
    %351 = vmatprep.subr.mxu0 0.0
    %352 = vmatpush1.xpose.msra.mxu0 0.0
    %353 = vmatprep.subr.mxu0 0.0
    %354 = vmatpush1.xpose.msra.mxu0 0.0
    %355 = vmatprep.subr.mxu0 0.0
    %356 = vmatpush1.xpose.msra.mxu0 0.0
    %357 = vmatprep.subr.mxu0 0.0
    %358 = vmatpush1.xpose.msra.mxu0 0.0
    %359 = vmatprep.subr.mxu0 0.0
    %360 = vmatpush1.xpose.msra.mxu0 0.0
    %361 = vmatprep.subr.mxu0 0.0
    %362 = vmatpush1.xpose.msra.mxu0 0.0
    %363 = vmatprep.subr.mxu0 0.0
    %364 = vmatpush1.xpose.msra.mxu0 0.0
    %365 = vmatprep.subr.mxu0 0.0
    %366 = vmatpush1.xpose.msra.mxu0 0.0
    %367 = vmatprep.subr.mxu0 0.0
    %368 = vmatpush1.xpose.msra.mxu0 0.0
    %369 = vmatprep.subr.mxu0 0.0
    %370 = vmatpush1.xpose.msra.mxu0 0.0
    %371 = vmatprep.subr.mxu0 0.0
    %372 = vmatpush1.xpose.msra.mxu0 0.0
    %373 = vmatprep.subr.mxu0 0.0
    %374 = vmatpush1.xpose.msra.mxu0 0.0
    %375 = vmatprep.subr.mxu0 0.0
    %376 = vmatpush1.xpose.msra.mxu0 0.0
    %377 = vmatprep.subr.mxu0 0.0
    %378 = vmatpush1.xpose.msra.mxu0 0.0
    %379 = vmatprep.subr.mxu0 0.0
    %380 = vmatpush1.xpose.msra.mxu0 0.0
    %381 = vmatprep.subr.mxu0 0.0
    %382 = vmatpush1.xpose.msra.mxu0 0.0
    %383 = vmatprep.subr.mxu0 0.0
    %384 = vmatpush1.xpose.msra.mxu0 0.0
    %385 = vmatprep.subr.mxu0 0.0
    %386 = vmatpush1.xpose.msra.mxu0 0.0
    %387 = vmatprep.subr.mxu0 0.0
    %388 = vmatpush1.xpose.msra.mxu0 0.0
    %389 = vmatprep.subr.mxu0 0.0
    %390 = vmatpush1.xpose.msra.mxu0 0.0
    %391 = vmatprep.subr.mxu0 0.0
    %392 = vmatpush1.xpose.msra.mxu0 0.0
    %393 = vmatprep.subr.mxu0 0.0
    %394 = vmatpush1.xpose.msra.mxu0 0.0
    %395 = vmatprep.subr.mxu0 0.0
    %396 = vmatpush1.xpose.msra.mxu0 0.0
    %397 = vmatprep.subr.mxu0 0.0
    %398 = vmatpush1.xpose.msra.mxu0 0.0
    %399 = vmatprep.subr.mxu0 0.0
    %400 = vmatpush1.xpose.msra.mxu0 0.0
    %401 = vmatprep.subr.mxu0 0.0
    %402 = vmatpush1.xpose.msra.mxu0 0.0
    %403 = vmatprep.subr.mxu0 0.0
    %404 = vmatpush1.xpose.msra.mxu0 0.0
    %405 = vmatprep.subr.mxu0 0.0
    %406 = vmatpush1.xpose.msra.mxu0 0.0
    %407 = vmatprep.mubr.f32.mxu0 0.0
    %408 = vmatmul.mubr.f32.gmra.mrb[0].mxu0 %v286
    %v409 = vpop.f32.mrb[0].mxu0
    %v410 = vadd.f32 0.0, %v409
    %v411 = vpop.f32.mrb[0].mxu0
    %412 = vdwg.mxu0
    %v413 = vlaneseq
    %v414 = vshrl.u32 %v413, 7
    %v415 = vsub.s32 0, %v414
    %v416 = vrot.slane %v410, %v415
    %v417 = vadd.f32 %v342, %v416
    %vm418 = vcmp.gt.f32.partialorder %v417, 0.0
    %v419 = vmul.f32 %v417, 0.2
    %v420 = vsel %vm418, %v417, %v419
    %v421 = vadd.f32 %v420, %v66
    %v422 = vsel %vm72, %v421, -inf
    %423 = vmax.xlane.f32.xlu0 %v422
    %v424 = vpop.xlane.xlu0 %423
    %v425 = vsub.f32 %v421, %v424
    %v426 = vmul.f32 %v425, 1.442695
    %v427 = vpow.pop %v426
    %v428 = vsel %vm72, %v427, 0.0
    %429 = vadd.xlane.f32.xlu0 %v428
    %v430 = vpop.xlane.xlu0 %429
    %v431 = vrcp.pop %v430
    %v432 = vmul.f32 %v427, %v431
    %v433 = vpack.c.bf16 %v432, %v432
    %v434 = vpack.c.bf16 %v331, %v331
    %v435 = vlaneseq
    %v436 = vshrl.u32 %v435, 7
    %v437 = vsub.s32 2, %v436
    %v438 = vrot.slane %v286, %v437
    %v440 = vsel %vm72, %v433, 0
    %v443 = vsel %vm76, %v434, 0
    %445 = vmatprep.subr.bf16.mxu0 0
    %446 = vmatpush1.bf16.msra.mxu0 %v443
    %447 = vmatprep.subr.bf16.mxu0 0
    %448 = vmatpush1.bf16.msra.mxu0 0
    %449 = vmatprep.subr.bf16.mxu0 0
    %450 = vmatpush1.bf16.msra.mxu0 0
    %451 = vmatprep.subr.bf16.mxu0 0
    %452 = vmatpush1.bf16.msra.mxu0 0
    %453 = vmatprep.subr.bf16.mxu0 0
    %454 = vmatpush1.bf16.msra.mxu0 0
    %455 = vmatprep.subr.bf16.mxu0 0
    %456 = vmatpush1.bf16.msra.mxu0 0
    %457 = vmatprep.subr.bf16.mxu0 0
    %458 = vmatpush1.bf16.msra.mxu0 0
    %459 = vmatprep.subr.bf16.mxu0 0
    %460 = vmatpush1.bf16.msra.mxu0 0
    %461 = vmatprep.subr.bf16.mxu0 0
    %462 = vmatpush1.bf16.msra.mxu0 0
    %463 = vmatprep.subr.bf16.mxu0 0
    %464 = vmatpush1.bf16.msra.mxu0 0
    %465 = vmatprep.subr.bf16.mxu0 0
    %466 = vmatpush1.bf16.msra.mxu0 0
    %467 = vmatprep.subr.bf16.mxu0 0
    %468 = vmatpush1.bf16.msra.mxu0 0
    %469 = vmatprep.subr.bf16.mxu0 0
    %470 = vmatpush1.bf16.msra.mxu0 0
    %471 = vmatprep.subr.bf16.mxu0 0
    %472 = vmatpush1.bf16.msra.mxu0 0
    %473 = vmatprep.subr.bf16.mxu0 0
    %474 = vmatpush1.bf16.msra.mxu0 0
    %475 = vmatprep.subr.bf16.mxu0 0
    %476 = vmatpush1.bf16.msra.mxu0 0
    %477 = vmatprep.mubr.bf16.mxu0 0
    %478 = vmatmul.mubr.bf16.gmra.mrb[0].mxu0 %v440
    %v479 = vpop.f32.mrb[0].mxu0
    %v480 = vadd.f32 %v438, %v479
    %v481 = vpop.f32.mrb[0].mxu0
    %v482 = vpop.f32.mrb[0].mxu0
    %v483 = vpop.f32.mrb[0].mxu0
    %484 = vdwg.mxu0
    %v485 = vmax.f32 %v480, 0.0
    %v486 = vld [vmem:[%s2] sm:$0x3]
    %v487 = vpack.c.bf16 %v486, %v486
    %v488 = vpack.c.bf16 %v485, %v485
    %v490 = vsel %vm72, %v487, 0
    %v493 = vsel %vm76, %v488, 0
    %495 = vmatprep.subr.bf16.mxu0 0
    %496 = vmatpush1.bf16.msra.mxu0 %v493
    %497 = vmatprep.subr.bf16.mxu0 0
    %498 = vmatpush1.bf16.msra.mxu0 0
    %499 = vmatprep.subr.bf16.mxu0 0
    %500 = vmatpush1.bf16.msra.mxu0 0
    %501 = vmatprep.subr.bf16.mxu0 0
    %502 = vmatpush1.bf16.msra.mxu0 0
    %503 = vmatprep.subr.bf16.mxu0 0
    %504 = vmatpush1.bf16.msra.mxu0 0
    %505 = vmatprep.subr.bf16.mxu0 0
    %506 = vmatpush1.bf16.msra.mxu0 0
    %507 = vmatprep.subr.bf16.mxu0 0
    %508 = vmatpush1.bf16.msra.mxu0 0
    %509 = vmatprep.subr.bf16.mxu0 0
    %510 = vmatpush1.bf16.msra.mxu0 0
    %511 = vmatprep.subr.bf16.mxu0 0
    %512 = vmatpush1.bf16.msra.mxu0 0
    %513 = vmatprep.subr.bf16.mxu0 0
    %514 = vmatpush1.bf16.msra.mxu0 0
    %515 = vmatprep.subr.bf16.mxu0 0
    %516 = vmatpush1.bf16.msra.mxu0 0
    %517 = vmatprep.subr.bf16.mxu0 0
    %518 = vmatpush1.bf16.msra.mxu0 0
    %519 = vmatprep.subr.bf16.mxu0 0
    %520 = vmatpush1.bf16.msra.mxu0 0
    %521 = vmatprep.subr.bf16.mxu0 0
    %522 = vmatpush1.bf16.msra.mxu0 0
    %523 = vmatprep.subr.bf16.mxu0 0
    %524 = vmatpush1.bf16.msra.mxu0 0
    %525 = vmatprep.subr.bf16.mxu0 0
    %526 = vmatpush1.bf16.msra.mxu0 0
    %527 = vmatprep.mubr.bf16.mxu0 0
    %528 = vmatmul.mubr.bf16.gmra.mrb[0].mxu0 %v490
    %v529 = vpop.f32.mrb[0].mxu0
    %v530 = vadd.f32 0.0, %v529
    %v531 = vpop.f32.mrb[0].mxu0
    %v532 = vpop.f32.mrb[0].mxu0
    %v533 = vpop.f32.mrb[0].mxu0
    %534 = vdwg.mxu0
    %535 = vst [vmem:[#allocation8] sm:$0x3] %v530
    // Predicated region
    $region42: #{tpu_custom_call.1} parent=1 // pred_check
      _
    $region43: #{tpu_custom_call.1} parent=1 // pred_check_branch
      %537 = sbr.rel (0) target = $region45
    $region44: #{tpu_custom_call.1} parent=1 // pred_region
      %s539 = ssub.s32 32, 32
      %540 = vsyncadd [#allocation4], %s539
      %s542 = sshll.u32 [#allocation8], 4
      %s543 = int_to_ptr.vmem [resolvable:$true] %s542
      %545 = dma.vmem_to_hbm [thread:$0]  %s543, 32, %s7, [#allocation4]
    $region45: #{tpu_custom_call.1} parent=1 // pred_fallthru
      _
    // Predicated region
    $region46: #{tpu_custom_call.1} parent=1 // pred_check
      _
    $region47: #{tpu_custom_call.1} parent=1 // pred_check_branch
      %547 = sbr.rel (0) target = $region49
    $region48: #{tpu_custom_call.1} parent=1 // pred_region
      %548 = dma.done [#allocation4], 32
    $region49: #{tpu_custom_call.1} parent=1 // pred_fallthru
      _
    %549 = vsyncpa [#allocation3], 1
    %550 = vsyncpa [#allocation6], 1
    %551 = vsyncpa [#allocation4], 1

</llo_original>
